<compile_context>
chip_gen: v6e
topology: v6e:2x2x1
jax: 0.10.0
libtpu: 0.0.40
codegen_flags: <defaults>
</compile_context>

<pallas_src>
import math

import jax
import jax.numpy as jnp
import numpy as np
from jax.experimental import pallas as pl
from jax.experimental.pallas import tpu as pltpu

_LANES = 128
_SUBCHUNK = 8          # sublane rows per inner working chunk (= one (8,128) vreg tile)


def _blocks_kernel(x_ref, beta_ref, b_ref, p_ref, invp_ref, out_ref,
                   a_s, vinit_s, smf_s, n0_s):
    """One time-block of the LIF recursion for one lane tile.

    x_ref / out_ref: (t_b, f_sub, 128); beta/b/p/1-over-p: (f_sub, 128);
    scratch carries: (f_sub, 128).
    """
    i = pl.program_id(1)                   # time-block index ("arbitrary" axis)
    t_b, f_rows, _ = x_ref.shape
    n_chunks = f_rows // _SUBCHUNK
    f32 = jnp.float32

    # (Re-)initialize carried state at the first time-block of every lane tile.
    @pl.when(i == 0)
    def _init():
        a_s[...] = jnp.zeros_like(a_s)
        vinit_s[...] = jnp.zeros_like(vinit_s)
        smf_s[...] = jnp.zeros_like(smf_s)
        n0_s[...] = jnp.zeros_like(n0_s)

    # TODO(synk): switch the chunk/time loops to lax.fori_loop with
    # scratch-resident carries for very large f_sub / t_latency; the static
    # unroll is bounded (n_chunks <= 16) and fine at these sizes.
    for ci in range(n_chunks):
        rs = pl.ds(ci * _SUBCHUNK, _SUBCHUNK)      # static (8,128) sub-tile

        beta = beta_ref[rs, :]
        bpar = b_ref[rs, :]
        p = p_ref[rs, :]
        inv_p = invp_ref[rs, :]
        a = a_s[rs, :]          # adaptation carry: a_kernel[t] == p^(t+1) * a
        vinit = vinit_s[rs, :]  # membrane carried in from the previous block
        smf = smf_s[rs, :]      # 1.0 iff the neuron spiked in the previous block
        n0 = n0_s[rs, :]        # prev block: number of leading steps with z == 0

        ba = bpar * a           # hoisted: v_th[t] = 1 + p^(t+1) * (b*a)
        zero = jnp.zeros_like(beta)
        one = jnp.ones_like(beta)

        c = zero
        z = zero
        acc_pa = zero           # sum_t p^(t+1) * spike[t]   (-> a_at_spike)
        dprod = one             # prod_t (z[t] > 1 ? p : 1)  (-> decay factor)
        new_smf = zero
        new_n0 = zero
        m = zero
        ppow = p                # p^(t+1) at step t (running product)

        for t in range(t_b):
            # Refractory masking from the previous block: zero the input
            # current while the previous block's z was still 0 and the neuron
            # spiked there.
            keep = 1.0 - smf * (n0 > float(t)).astype(f32)
            x_t = x_ref[t, rs, :] * keep
            if t == 0:
                m = x_t + beta * vinit      # leaky integration (grouped conv1d)
            else:
                m = beta * m + x_t
            vth_t = 1.0 + ppow * ba
            s_t = (m > vth_t).astype(f32)   # FastSigmoid forward: heaviside
            c = c + s_t
            z = z + c                       # z = cumsum(cumsum(s))  (phi conv2d)
            ltb = z < 1.0
            gtb = z > 1.0
            lt = ltb.astype(f32)
            gt = gtb.astype(f32)
            spk = 1.0 - lt - gt             # z is a nonneg integer -> (z == 1)
            out_ref[t, rs, :] = spk
            # next-block carry statistics, accumulated per step
            new_smf = jnp.maximum(new_smf, spk)
            new_n0 = new_n0 + lt
            acc_pa = acc_pa + ppow * spk
            dprod = dprod * jnp.where(gtb, p, one)
            if t + 1 < t_b:
                ppow = ppow * p
        # after the loop: ppow == p^t_b (last a_kernel row), m == last membrane

        # Carry updates feeding the next time-block.
        a_at_spike = a * acc_pa + inv_p                  # (a_kernel*spikes).sum + 1/p
        new_a = a_at_spike * dprod                       # * p^decay_steps
        keep_a = 1.0 - new_smf
        a_s[rs, :] = (ppow * a) * keep_a + new_a * new_smf
        vinit_s[rs, :] = m * keep_a                      # int_mem * ~spike_mask
        smf_s[rs, :] = new_smf
        n0_s[rs, :] = new_n0


# TODO(synk): recurrent=True path (rec_weight einsum feedback between blocks)
# not implemented; default Blocks(..., recurrent=False) semantics only.
# Forward pass only (FastSigmoid surrogate gradient is backward-only).


def _pick_tiling(feat, t_b):
    """Choose (f_sub sublane rows per tile, n_f tiles, padded rows)."""
    rows = -(-feat // _LANES)                        # lane rows needed
    rows = -(-rows // _SUBCHUNK) * _SUBCHUNK         # multiple of 8 sublanes
    # Double-buffered working set per sublane row (f32):
    #   x + out blocks (2 arrays * 2 buffers * t_b rows)
    #   + 4 param rows (double-buffered) + 4 carry rows.
    bytes_per_row = 4 * _LANES * (2 * 2 * t_b + 2 * 4 + 4)
    budget = 24 << 20                                # safe on v5e/v6e/v7x VMEM
    max_rows = max(_SUBCHUNK, (budget // bytes_per_row) // _SUBCHUNK * _SUBCHUNK)
    compile_cap = 16 * _SUBCHUNK                     # keep static unroll bounded
    f_sub = int(min(rows, max_rows, compile_cap))
    n_f = -(-rows // f_sub)
    # TODO(synk): on v7x (2 TCs), prefer n_f >= 2 (halve f_sub) so the leading
    # "parallel" axis shards across both cores; on v6e a single fat tile wins.
    return f_sub, n_f, n_f * f_sub, bytes_per_row


def blocks_forward(x, beta_raw, p_raw, b_raw, t_latency):
    """Pallas implementation of Blocks.forward (recurrent=False, adapt=True)."""
    t_len, batch, n_out = x.shape
    t_b = t_latency + 1
    n_blocks = math.ceil(t_len / t_b)
    t_pad = n_blocks * t_b - t_len

    feat = batch * n_out
    f_sub, n_f, rows_pad, bytes_per_row = _pick_tiling(feat, t_b)
    f_pad = rows_pad * _LANES

    # Contiguous per-block layout: (n_f, n_blocks, t_b, f_sub, 128).
    x2 = x.astype(jnp.float32).reshape(t_len, feat)
    x2 = jnp.pad(x2, ((0, t_pad), (0, f_pad - feat)))
    x5 = x2.reshape(n_blocks, t_b, n_f, f_sub, _LANES).transpose(2, 0, 1, 3, 4)

    beta = jnp.clip(beta_raw, 0.001, 0.999).astype(jnp.float32)
    p = jnp.clip(jnp.abs(p_raw), 0.0, 0.999).astype(jnp.float32)
    b = jnp.clip(jnp.abs(b_raw), 0.001, 1.0).astype(jnp.float32)

    def widen(v, pad_val):
        w = jnp.broadcast_to(v[None, :], (batch, n_out)).reshape(feat)
        w = jnp.pad(w, (0, f_pad - feat), constant_values=pad_val)
        return w.reshape(n_f, f_sub, _LANES)

    beta_w = widen(beta, 0.0)
    b_w = widen(b, 1.0)
    p_w = widen(p, 1.0)          # pad with 1 so 1/p stays finite in dead lanes
    inv_p_w = 1.0 / p_w          # matches the module's 1/p (inf only if p == 0)

    need = bytes_per_row * f_sub
    vmem_limit = int(min(max(2 * need, 32 << 20), 48 << 20))

    param_spec = pl.BlockSpec((None, f_sub, _LANES), lambda f, i: (f, 0, 0))
    block_spec = pl.BlockSpec((None, None, t_b, f_sub, _LANES),
                              lambda f, i: (f, i, 0, 0, 0))

    out = pl.pallas_call(
        _blocks_kernel,
        out_shape=jax.ShapeDtypeStruct((n_f, n_blocks, t_b, f_sub, _LANES),
                                       jnp.float32),
        grid_spec=pltpu.PrefetchScalarGridSpec(
            num_scalar_prefetch=0,
            grid=(n_f, n_blocks),       # (parallel lane tiles, sequential time blocks)
            in_specs=[
                block_spec,             # x
                param_spec,             # beta
                param_spec,             # b
                param_spec,             # p
                param_spec,             # 1/p
            ],
            out_specs=block_spec,
            scratch_shapes=[
                pltpu.VMEM((f_sub, _LANES), jnp.float32),   # a (adaptation carry)
                pltpu.VMEM((f_sub, _LANES), jnp.float32),   # v_init carry
                pltpu.VMEM((f_sub, _LANES), jnp.float32),   # spiked-in-prev-block flag
                pltpu.VMEM((f_sub, _LANES), jnp.float32),   # prev-block refractory length
            ],
        ),
        compiler_params=pltpu.CompilerParams(
            dimension_semantics=("parallel", "arbitrary"),
            vmem_limit_bytes=vmem_limit),
    )(x5, beta_w, b_w, p_w, inv_p_w)

    out = out.transpose(1, 2, 0, 3, 4).reshape(n_blocks * t_b, f_pad)
    out = out[:t_len, :feat]
    return out.reshape(t_len, batch, n_out)


def blocks_reference(x, beta_raw, p_raw, b_raw, t_latency):
    """Pure-JAX reference with the module's semantics (arithmetic ordered to
    match the kernel bit-for-bit so an exact-match check is meaningful)."""
    t_len, batch, n_out = x.shape
    t_b = t_latency + 1
    n_blocks = math.ceil(t_len / t_b)
    t_pad = n_blocks * t_b - t_len
    if t_pad:
        x = jnp.pad(x, ((0, t_pad), (0, 0), (0, 0)))
    x = x.astype(jnp.float32)
    beta = jnp.clip(beta_raw, 0.001, 0.999).astype(jnp.float32)
    p = jnp.clip(jnp.abs(p_raw), 0.0, 0.999).astype(jnp.float32)
    b = jnp.clip(jnp.abs(b_raw), 0.001, 1.0).astype(jnp.float32)

    # p_pow[t] = p^(t+1), built as a sequential running product.
    pp, cur = [], p
    for t in range(t_b):
        pp.append(cur)
        if t + 1 < t_b:
            cur = cur * p
    p_pow = jnp.stack(pp)                               # (t_b, n_out)

    a = jnp.zeros((batch, n_out), jnp.float32)
    ba = jnp.zeros((batch, n_out), jnp.float32)
    v_init = jnp.zeros((batch, n_out), jnp.float32)
    int_mem = jnp.zeros((batch, n_out), jnp.float32)
    spikes = None
    z = None
    outs = []
    for i in range(n_blocks):
        x_slice = x[i * t_b:(i + 1) * t_b]
        if i > 0:
            smf = (jnp.max(spikes, axis=0) > 0.5).astype(jnp.float32)
            refac = (z < smf[None]).astype(jnp.float32)
            x_slice = x_slice * (1.0 - refac)
            v_init = int_mem * (1.0 - smf)
            a_kernel = p_pow[:, None, :] * a[None]
            a_at_spike = jnp.sum(a_kernel * spikes, axis=0) + 1.0 / p[None, :]
            dfac = jnp.ones((batch, n_out), jnp.float32)
            for t in range(t_b):
                dfac = dfac * jnp.where(z[t] > 1.0, p[None, :], 1.0)
            new_a = a_at_spike * dfac
            a = a_kernel[-1] * (1.0 - smf) + new_a * smf
            ba = b[None, :] * a
        v_th = 1.0 + p_pow[:, None, :] * ba[None]       # == 1 for the first block
        cur_blk = x_slice.at[0].add(beta[None, :] * v_init)
        mem = []
        m = cur_blk[0]
        for t in range(t_b):
            if t > 0:
                m = beta[None, :] * m + cur_blk[t]
            mem.append(m)
        mem = jnp.stack(mem)
        s = (mem > v_th).astype(jnp.float32)
        c = jnp.cumsum(s, axis=0)
        z = jnp.cumsum(c, axis=0)
        spikes = jnp.where(z == 1.0, 1.0, 0.0)
        int_mem = mem[-1]
        outs.append(spikes)
    out = jnp.concatenate(outs, axis=0)
    if t_pad:
        out = out[:t_len]
    return out


if __name__ == "__main__":
    # Small shapes consistent with the module: x is (t_len, batch, n_out).
    t_len, batch, n_out = 18, 4, 32
    t_latency = 4                       # -> t_len_block = 5, n_blocks = 4, t_pad = 2
    init_beta, init_p, init_b = 1.0, 1.0, 1.8   # deterministic params per __init__

    key = jax.random.PRNGKey(0)
    x = jax.random.normal(key, (t_len, batch, n_out), dtype=jnp.float32) * 0.6

    beta_raw = jnp.full((n_out,), init_beta, jnp.float32)
    p_raw = jnp.full((n_out,), init_p, jnp.float32)
    b_raw = jnp.full((n_out,), init_b, jnp.float32)

    out = jax.block_until_ready(blocks_forward(x, beta_raw, p_raw, b_raw, t_latency))
    ref = jax.block_until_ready(blocks_reference(x, beta_raw, p_raw, b_raw, t_latency))

    assert out.shape == (t_len, batch, n_out), out.shape
    out_np = np.asarray(out)
    ref_np = np.asarray(ref)
    n_mismatch = int(np.sum(out_np != ref_np))
    assert n_mismatch == 0, f"{n_mismatch} spike mismatches vs reference"
    print("KERNEL_OK")
</pallas_src>

<mosaic_0001>
module attributes {stable_mosaic.version = 11 : i64} {
  func.func @_blocks_kernel(%arg0: i32, %arg1: i32, %arg2: memref<1x1x5x8x128xf32, #tpu.memory_space<vmem>>, %arg3: memref<1x8x128xf32, #tpu.memory_space<vmem>>, %arg4: memref<1x8x128xf32, #tpu.memory_space<vmem>>, %arg5: memref<1x8x128xf32, #tpu.memory_space<vmem>>, %arg6: memref<1x8x128xf32, #tpu.memory_space<vmem>>, %arg7: memref<1x1x5x8x128xf32, #tpu.memory_space<vmem>>, %arg8: memref<8x128xf32, #tpu.memory_space<vmem>>, %arg9: memref<8x128xf32, #tpu.memory_space<vmem>>, %arg10: memref<8x128xf32, #tpu.memory_space<vmem>>, %arg11: memref<8x128xf32, #tpu.memory_space<vmem>>) attributes {dimension_semantics = [#tpu.dimension_semantics<parallel>, #tpu.dimension_semantics<arbitrary>], iteration_bounds = array<i64: 1, 4>, scalar_prefetch = 0 : i64, scratch_operands = 4 : i64, tpu.core_type = #tpu.core_type<tc>, window_params = [{transform_indices = @transform_0, window_bounds = array<i64: 1, 1, 5, 8, 128>}, {transform_indices = @transform_1, window_bounds = array<i64: 1, 8, 128>}, {transform_indices = @transform_2, window_bounds = array<i64: 1, 8, 128>}, {transform_indices = @transform_3, window_bounds = array<i64: 1, 8, 128>}, {transform_indices = @transform_4, window_bounds = array<i64: 1, 8, 128>}, {transform_indices = @transform_5, window_bounds = array<i64: 1, 1, 5, 8, 128>}]} {
    %c0_i32 = arith.constant 0 : i32
    %0 = arith.cmpi eq, %arg1, %c0_i32 : i32
    %1 = arith.extui %0 : i1 to i32
    %c0_i32_0 = arith.constant 0 : i32
    %2 = arith.cmpi ne, %1, %c0_i32_0 : i32
    scf.if %2 {
      %cst_106 = arith.constant 0.000000e+00 : f32
      %236 = vector.broadcast %cst_106 : f32 to vector<8x128xf32>
      %c0_107 = arith.constant 0 : index
      %c0_108 = arith.constant 0 : index
      %237 = vector.load %arg8[%c0_107, %c0_108] : memref<8x128xf32, #tpu.memory_space<vmem>>, vector<8x128xf32>
      tpu.vector_store %arg8[%c0_107, %c0_108], %236 {strides = array<i32>} : memref<8x128xf32, #tpu.memory_space<vmem>>, vector<8x128xf32>,
      %cst_109 = arith.constant 0.000000e+00 : f32
      %238 = vector.broadcast %cst_109 : f32 to vector<8x128xf32>
      %c0_110 = arith.constant 0 : index
      %c0_111 = arith.constant 0 : index
      %239 = vector.load %arg9[%c0_110, %c0_111] : memref<8x128xf32, #tpu.memory_space<vmem>>, vector<8x128xf32>
      tpu.vector_store %arg9[%c0_110, %c0_111], %238 {strides = array<i32>} : memref<8x128xf32, #tpu.memory_space<vmem>>, vector<8x128xf32>,
      %cst_112 = arith.constant 0.000000e+00 : f32
      %240 = vector.broadcast %cst_112 : f32 to vector<8x128xf32>
      %c0_113 = arith.constant 0 : index
      %c0_114 = arith.constant 0 : index
      %241 = vector.load %arg10[%c0_113, %c0_114] : memref<8x128xf32, #tpu.memory_space<vmem>>, vector<8x128xf32>
      tpu.vector_store %arg10[%c0_113, %c0_114], %240 {strides = array<i32>} : memref<8x128xf32, #tpu.memory_space<vmem>>, vector<8x128xf32>,
      %cst_115 = arith.constant 0.000000e+00 : f32
      %242 = vector.broadcast %cst_115 : f32 to vector<8x128xf32>
      %c0_116 = arith.constant 0 : index
      %c0_117 = arith.constant 0 : index
      %243 = vector.load %arg11[%c0_116, %c0_117] : memref<8x128xf32, #tpu.memory_space<vmem>>, vector<8x128xf32>
      tpu.vector_store %arg11[%c0_116, %c0_117], %242 {strides = array<i32>} : memref<8x128xf32, #tpu.memory_space<vmem>>, vector<8x128xf32>,
    } else {
    }
    %c0 = arith.constant 0 : index
    %c0_1 = arith.constant 0 : index
    %c0_2 = arith.constant 0 : index
    %3 = vector.load %arg3[%c0, %c0_1, %c0_2] : memref<1x8x128xf32, #tpu.memory_space<vmem>>, vector<1x8x128xf32>
    %4 = vector.shape_cast %3 : vector<1x8x128xf32> to vector<8x128xf32>
    %c0_3 = arith.constant 0 : index
    %c0_4 = arith.constant 0 : index
    %c0_5 = arith.constant 0 : index
    %5 = vector.load %arg4[%c0_3, %c0_4, %c0_5] : memref<1x8x128xf32, #tpu.memory_space<vmem>>, vector<1x8x128xf32>
    %6 = vector.shape_cast %5 : vector<1x8x128xf32> to vector<8x128xf32>
    %c0_6 = arith.constant 0 : index
    %c0_7 = arith.constant 0 : index
    %c0_8 = arith.constant 0 : index
    %7 = vector.load %arg5[%c0_6, %c0_7, %c0_8] : memref<1x8x128xf32, #tpu.memory_space<vmem>>, vector<1x8x128xf32>
    %8 = vector.shape_cast %7 : vector<1x8x128xf32> to vector<8x128xf32>
    %c0_9 = arith.constant 0 : index
    %c0_10 = arith.constant 0 : index
    %c0_11 = arith.constant 0 : index
    %9 = vector.load %arg6[%c0_9, %c0_10, %c0_11] : memref<1x8x128xf32, #tpu.memory_space<vmem>>, vector<1x8x128xf32>
    %10 = vector.shape_cast %9 : vector<1x8x128xf32> to vector<8x128xf32>
    %c0_12 = arith.constant 0 : index
    %c0_13 = arith.constant 0 : index
    %11 = vector.load %arg8[%c0_12, %c0_13] : memref<8x128xf32, #tpu.memory_space<vmem>>, vector<8x128xf32>
    %c0_14 = arith.constant 0 : index
    %c0_15 = arith.constant 0 : index
    %12 = vector.load %arg9[%c0_14, %c0_15] : memref<8x128xf32, #tpu.memory_space<vmem>>, vector<8x128xf32>
    %c0_16 = arith.constant 0 : index
    %c0_17 = arith.constant 0 : index
    %13 = vector.load %arg10[%c0_16, %c0_17] : memref<8x128xf32, #tpu.memory_space<vmem>>, vector<8x128xf32>
    %c0_18 = arith.constant 0 : index
    %c0_19 = arith.constant 0 : index
    %14 = vector.load %arg11[%c0_18, %c0_19] : memref<8x128xf32, #tpu.memory_space<vmem>>, vector<8x128xf32>
    %15 = arith.mulf %6, %11 : vector<8x128xf32>
    %cst = arith.constant 0.000000e+00 : f32
    %16 = vector.broadcast %cst : f32 to vector<8x128xf32>
    %cst_20 = arith.constant 1.000000e+00 : f32
    %17 = vector.broadcast %cst_20 : f32 to vector<8x128xf32>
    %cst_21 = arith.constant 0.000000e+00 : f32
    %18 = vector.broadcast %cst_21 : f32 to vector<8x128xf32>
    %19 = arith.cmpf ogt, %14, %18 : vector<8x128xf32>
    %20 = arith.extui %19 : vector<8x128xi1> to vector<8x128xi32>
    %21 = arith.sitofp %20 : vector<8x128xi32> to vector<8x128xf32>
    %22 = arith.mulf %13, %21 : vector<8x128xf32>
    %cst_22 = arith.constant 1.000000e+00 : f32
    %23 = vector.broadcast %cst_22 : f32 to vector<8x128xf32>
    %24 = arith.subf %23, %22 : vector<8x128xf32>
    %c0_23 = arith.constant 0 : index
    %c0_24 = arith.constant 0 : index
    %c0_25 = arith.constant 0 : index
    %c0_26 = arith.constant 0 : index
    %c0_27 = arith.constant 0 : index
    %25 = vector.load %arg2[%c0_23, %c0_24, %c0_25, %c0_26, %c0_27] : memref<1x1x5x8x128xf32, #tpu.memory_space<vmem>>, vector<1x1x1x8x128xf32>
    %26 = vector.shape_cast %25 : vector<1x1x1x8x128xf32> to vector<8x128xf32>
    %27 = arith.mulf %26, %24 : vector<8x128xf32>
    %28 = arith.mulf %4, %12 : vector<8x128xf32>
    %29 = arith.addf %27, %28 : vector<8x128xf32>
    %30 = arith.mulf %8, %15 : vector<8x128xf32>
    %cst_28 = arith.constant 1.000000e+00 : f32
    %31 = vector.broadcast %cst_28 : f32 to vector<8x128xf32>
    %32 = arith.addf %31, %30 : vector<8x128xf32>
    %33 = arith.cmpf ogt, %29, %32 : vector<8x128xf32>
    %34 = arith.extui %33 : vector<8x128xi1> to vector<8x128xi32>
    %35 = arith.sitofp %34 : vector<8x128xi32> to vector<8x128xf32>
    %36 = arith.addf %16, %35 : vector<8x128xf32>
    %37 = arith.addf %16, %36 : vector<8x128xf32>
    %cst_29 = arith.constant 1.000000e+00 : f32
    %38 = vector.broadcast %cst_29 : f32 to vector<8x128xf32>
    %39 = arith.cmpf olt, %37, %38 : vector<8x128xf32>
    %cst_30 = arith.constant 1.000000e+00 : f32
    %40 = vector.broadcast %cst_30 : f32 to vector<8x128xf32>
    %41 = arith.cmpf ogt, %37, %40 : vector<8x128xf32>
    %42 = arith.extui %39 : vector<8x128xi1> to vector<8x128xi32>
    %43 = arith.sitofp %42 : vector<8x128xi32> to vector<8x128xf32>
    %44 = arith.extui %41 : vector<8x128xi1> to vector<8x128xi32>
    %45 = arith.sitofp %44 : vector<8x128xi32> to vector<8x128xf32>
    %cst_31 = arith.constant 1.000000e+00 : f32
    %46 = vector.broadcast %cst_31 : f32 to vector<8x128xf32>
    %47 = arith.subf %46, %43 : vector<8x128xf32>
    %48 = arith.subf %47, %45 : vector<8x128xf32>
    %c0_32 = arith.constant 0 : index
    %c0_33 = arith.constant 0 : index
    %c0_34 = arith.constant 0 : index
    %c0_35 = arith.constant 0 : index
    %c0_36 = arith.constant 0 : index
    %49 = vector.load %arg7[%c0_32, %c0_33, %c0_34, %c0_35, %c0_36] : memref<1x1x5x8x128xf32, #tpu.memory_space<vmem>>, vector<1x1x1x8x128xf32>
    %50 = vector.shape_cast %49 : vector<1x1x1x8x128xf32> to vector<8x128xf32>
    %51 = vector.shape_cast %48 : vector<8x128xf32> to vector<1x1x1x8x128xf32>
    tpu.vector_store %arg7[%c0_32, %c0_33, %c0_34, %c0_35, %c0_36], %51 {strides = array<i32>} : memref<1x1x5x8x128xf32, #tpu.memory_space<vmem>>, vector<1x1x1x8x128xf32>,
    %52 = arith.maximumf %16, %48 : vector<8x128xf32>
    %53 = arith.addf %16, %43 : vector<8x128xf32>
    %54 = arith.mulf %8, %48 : vector<8x128xf32>
    %55 = arith.addf %16, %54 : vector<8x128xf32>
    %56 = arith.select %41, %8, %17 : vector<8x128xi1>, vector<8x128xf32>
    %57 = arith.mulf %17, %56 : vector<8x128xf32>
    %58 = arith.mulf %8, %8 : vector<8x128xf32>
    %cst_37 = arith.constant 1.000000e+00 : f32
    %59 = vector.broadcast %cst_37 : f32 to vector<8x128xf32>
    %60 = arith.cmpf ogt, %14, %59 : vector<8x128xf32>
    %61 = arith.extui %60 : vector<8x128xi1> to vector<8x128xi32>
    %62 = arith.sitofp %61 : vector<8x128xi32> to vector<8x128xf32>
    %63 = arith.mulf %13, %62 : vector<8x128xf32>
    %cst_38 = arith.constant 1.000000e+00 : f32
    %64 = vector.broadcast %cst_38 : f32 to vector<8x128xf32>
    %65 = arith.subf %64, %63 : vector<8x128xf32>
    %c0_39 = arith.constant 0 : index
    %c0_40 = arith.constant 0 : index
    %c1 = arith.constant 1 : index
    %c0_41 = arith.constant 0 : index
    %c0_42 = arith.constant 0 : index
    %66 = vector.load %arg2[%c0_39, %c0_40, %c1, %c0_41, %c0_42] : memref<1x1x5x8x128xf32, #tpu.memory_space<vmem>>, vector<1x1x1x8x128xf32>
    %67 = vector.shape_cast %66 : vector<1x1x1x8x128xf32> to vector<8x128xf32>
    %68 = arith.mulf %67, %65 : vector<8x128xf32>
    %69 = arith.mulf %4, %29 : vector<8x128xf32>
    %70 = arith.addf %69, %68 : vector<8x128xf32>
    %71 = arith.mulf %58, %15 : vector<8x128xf32>
    %cst_43 = arith.constant 1.000000e+00 : f32
    %72 = vector.broadcast %cst_43 : f32 to vector<8x128xf32>
    %73 = arith.addf %72, %71 : vector<8x128xf32>
    %74 = arith.cmpf ogt, %70, %73 : vector<8x128xf32>
    %75 = arith.extui %74 : vector<8x128xi1> to vector<8x128xi32>
    %76 = arith.sitofp %75 : vector<8x128xi32> to vector<8x128xf32>
    %77 = arith.addf %36, %76 : vector<8x128xf32>
    %78 = arith.addf %37, %77 : vector<8x128xf32>
    %cst_44 = arith.constant 1.000000e+00 : f32
    %79 = vector.broadcast %cst_44 : f32 to vector<8x128xf32>
    %80 = arith.cmpf olt, %78, %79 : vector<8x128xf32>
    %cst_45 = arith.constant 1.000000e+00 : f32
    %81 = vector.broadcast %cst_45 : f32 to vector<8x128xf32>
    %82 = arith.cmpf ogt, %78, %81 : vector<8x128xf32>
    %83 = arith.extui %80 : vector<8x128xi1> to vector<8x128xi32>
    %84 = arith.sitofp %83 : vector<8x128xi32> to vector<8x128xf32>
    %85 = arith.extui %82 : vector<8x128xi1> to vector<8x128xi32>
    %86 = arith.sitofp %85 : vector<8x128xi32> to vector<8x128xf32>
    %cst_46 = arith.constant 1.000000e+00 : f32
    %87 = vector.broadcast %cst_46 : f32 to vector<8x128xf32>
    %88 = arith.subf %87, %84 : vector<8x128xf32>
    %89 = arith.subf %88, %86 : vector<8x128xf32>
    %c0_47 = arith.constant 0 : index
    %c0_48 = arith.constant 0 : index
    %c1_49 = arith.constant 1 : index
    %c0_50 = arith.constant 0 : index
    %c0_51 = arith.constant 0 : index
    %90 = vector.load %arg7[%c0_47, %c0_48, %c1_49, %c0_50, %c0_51] : memref<1x1x5x8x128xf32, #tpu.memory_space<vmem>>, vector<1x1x1x8x128xf32>
    %91 = vector.shape_cast %90 : vector<1x1x1x8x128xf32> to vector<8x128xf32>
    %92 = vector.shape_cast %89 : vector<8x128xf32> to vector<1x1x1x8x128xf32>
    tpu.vector_store %arg7[%c0_47, %c0_48, %c1_49, %c0_50, %c0_51], %92 {strides = array<i32>} : memref<1x1x5x8x128xf32, #tpu.memory_space<vmem>>, vector<1x1x1x8x128xf32>,
    %93 = arith.maximumf %52, %89 : vector<8x128xf32>
    %94 = arith.addf %53, %84 : vector<8x128xf32>
    %95 = arith.mulf %58, %89 : vector<8x128xf32>
    %96 = arith.addf %55, %95 : vector<8x128xf32>
    %97 = arith.select %82, %8, %17 : vector<8x128xi1>, vector<8x128xf32>
    %98 = arith.mulf %57, %97 : vector<8x128xf32>
    %99 = arith.mulf %58, %8 : vector<8x128xf32>
    %cst_52 = arith.constant 2.000000e+00 : f32
    %100 = vector.broadcast %cst_52 : f32 to vector<8x128xf32>
    %101 = arith.cmpf ogt, %14, %100 : vector<8x128xf32>
    %102 = arith.extui %101 : vector<8x128xi1> to vector<8x128xi32>
    %103 = arith.sitofp %102 : vector<8x128xi32> to vector<8x128xf32>
    %104 = arith.mulf %13, %103 : vector<8x128xf32>
    %cst_53 = arith.constant 1.000000e+00 : f32
    %105 = vector.broadcast %cst_53 : f32 to vector<8x128xf32>
    %106 = arith.subf %105, %104 : vector<8x128xf32>
    %c0_54 = arith.constant 0 : index
    %c0_55 = arith.constant 0 : index
    %c2 = arith.constant 2 : index
    %c0_56 = arith.constant 0 : index
    %c0_57 = arith.constant 0 : index
    %107 = vector.load %arg2[%c0_54, %c0_55, %c2, %c0_56, %c0_57] : memref<1x1x5x8x128xf32, #tpu.memory_space<vmem>>, vector<1x1x1x8x128xf32>
    %108 = vector.shape_cast %107 : vector<1x1x1x8x128xf32> to vector<8x128xf32>
    %109 = arith.mulf %108, %106 : vector<8x128xf32>
    %110 = arith.mulf %4, %70 : vector<8x128xf32>
    %111 = arith.addf %110, %109 : vector<8x128xf32>
    %112 = arith.mulf %99, %15 : vector<8x128xf32>
    %cst_58 = arith.constant 1.000000e+00 : f32
    %113 = vector.broadcast %cst_58 : f32 to vector<8x128xf32>
    %114 = arith.addf %113, %112 : vector<8x128xf32>
    %115 = arith.cmpf ogt, %111, %114 : vector<8x128xf32>
    %116 = arith.extui %115 : vector<8x128xi1> to vector<8x128xi32>
    %117 = arith.sitofp %116 : vector<8x128xi32> to vector<8x128xf32>
    %118 = arith.addf %77, %117 : vector<8x128xf32>
    %119 = arith.addf %78, %118 : vector<8x128xf32>
    %cst_59 = arith.constant 1.000000e+00 : f32
    %120 = vector.broadcast %cst_59 : f32 to vector<8x128xf32>
    %121 = arith.cmpf olt, %119, %120 : vector<8x128xf32>
    %cst_60 = arith.constant 1.000000e+00 : f32
    %122 = vector.broadcast %cst_60 : f32 to vector<8x128xf32>
    %123 = arith.cmpf ogt, %119, %122 : vector<8x128xf32>
    %124 = arith.extui %121 : vector<8x128xi1> to vector<8x128xi32>
    %125 = arith.sitofp %124 : vector<8x128xi32> to vector<8x128xf32>
    %126 = arith.extui %123 : vector<8x128xi1> to vector<8x128xi32>
    %127 = arith.sitofp %126 : vector<8x128xi32> to vector<8x128xf32>
    %cst_61 = arith.constant 1.000000e+00 : f32
    %128 = vector.broadcast %cst_61 : f32 to vector<8x128xf32>
    %129 = arith.subf %128, %125 : vector<8x128xf32>
    %130 = arith.subf %129, %127 : vector<8x128xf32>
    %c0_62 = arith.constant 0 : index
    %c0_63 = arith.constant 0 : index
    %c2_64 = arith.constant 2 : index
    %c0_65 = arith.constant 0 : index
    %c0_66 = arith.constant 0 : index
    %131 = vector.load %arg7[%c0_62, %c0_63, %c2_64, %c0_65, %c0_66] : memref<1x1x5x8x128xf32, #tpu.memory_space<vmem>>, vector<1x1x1x8x128xf32>
    %132 = vector.shape_cast %131 : vector<1x1x1x8x128xf32> to vector<8x128xf32>
    %133 = vector.shape_cast %130 : vector<8x128xf32> to vector<1x1x1x8x128xf32>
    tpu.vector_store %arg7[%c0_62, %c0_63, %c2_64, %c0_65, %c0_66], %133 {strides = array<i32>} : memref<1x1x5x8x128xf32, #tpu.memory_space<vmem>>, vector<1x1x1x8x128xf32>,
    %134 = arith.maximumf %93, %130 : vector<8x128xf32>
    %135 = arith.addf %94, %125 : vector<8x128xf32>
    %136 = arith.mulf %99, %130 : vector<8x128xf32>
    %137 = arith.addf %96, %136 : vector<8x128xf32>
    %138 = arith.select %123, %8, %17 : vector<8x128xi1>, vector<8x128xf32>
    %139 = arith.mulf %98, %138 : vector<8x128xf32>
    %140 = arith.mulf %99, %8 : vector<8x128xf32>
    %cst_67 = arith.constant 3.000000e+00 : f32
    %141 = vector.broadcast %cst_67 : f32 to vector<8x128xf32>
    %142 = arith.cmpf ogt, %14, %141 : vector<8x128xf32>
    %143 = arith.extui %142 : vector<8x128xi1> to vector<8x128xi32>
    %144 = arith.sitofp %143 : vector<8x128xi32> to vector<8x128xf32>
    %145 = arith.mulf %13, %144 : vector<8x128xf32>
    %cst_68 = arith.constant 1.000000e+00 : f32
    %146 = vector.broadcast %cst_68 : f32 to vector<8x128xf32>
    %147 = arith.subf %146, %145 : vector<8x128xf32>
    %c0_69 = arith.constant 0 : index
    %c0_70 = arith.constant 0 : index
    %c3 = arith.constant 3 : index
    %c0_71 = arith.constant 0 : index
    %c0_72 = arith.constant 0 : index
    %148 = vector.load %arg2[%c0_69, %c0_70, %c3, %c0_71, %c0_72] : memref<1x1x5x8x128xf32, #tpu.memory_space<vmem>>, vector<1x1x1x8x128xf32>
    %149 = vector.shape_cast %148 : vector<1x1x1x8x128xf32> to vector<8x128xf32>
    %150 = arith.mulf %149, %147 : vector<8x128xf32>
    %151 = arith.mulf %4, %111 : vector<8x128xf32>
    %152 = arith.addf %151, %150 : vector<8x128xf32>
    %153 = arith.mulf %140, %15 : vector<8x128xf32>
    %cst_73 = arith.constant 1.000000e+00 : f32
    %154 = vector.broadcast %cst_73 : f32 to vector<8x128xf32>
    %155 = arith.addf %154, %153 : vector<8x128xf32>
    %156 = arith.cmpf ogt, %152, %155 : vector<8x128xf32>
    %157 = arith.extui %156 : vector<8x128xi1> to vector<8x128xi32>
    %158 = arith.sitofp %157 : vector<8x128xi32> to vector<8x128xf32>
    %159 = arith.addf %118, %158 : vector<8x128xf32>
    %160 = arith.addf %119, %159 : vector<8x128xf32>
    %cst_74 = arith.constant 1.000000e+00 : f32
    %161 = vector.broadcast %cst_74 : f32 to vector<8x128xf32>
    %162 = arith.cmpf olt, %160, %161 : vector<8x128xf32>
    %cst_75 = arith.constant 1.000000e+00 : f32
    %163 = vector.broadcast %cst_75 : f32 to vector<8x128xf32>
    %164 = arith.cmpf ogt, %160, %163 : vector<8x128xf32>
    %165 = arith.extui %162 : vector<8x128xi1> to vector<8x128xi32>
    %166 = arith.sitofp %165 : vector<8x128xi32> to vector<8x128xf32>
    %167 = arith.extui %164 : vector<8x128xi1> to vector<8x128xi32>
    %168 = arith.sitofp %167 : vector<8x128xi32> to vector<8x128xf32>
    %cst_76 = arith.constant 1.000000e+00 : f32
    %169 = vector.broadcast %cst_76 : f32 to vector<8x128xf32>
    %170 = arith.subf %169, %166 : vector<8x128xf32>
    %171 = arith.subf %170, %168 : vector<8x128xf32>
    %c0_77 = arith.constant 0 : index
    %c0_78 = arith.constant 0 : index
    %c3_79 = arith.constant 3 : index
    %c0_80 = arith.constant 0 : index
    %c0_81 = arith.constant 0 : index
    %172 = vector.load %arg7[%c0_77, %c0_78, %c3_79, %c0_80, %c0_81] : memref<1x1x5x8x128xf32, #tpu.memory_space<vmem>>, vector<1x1x1x8x128xf32>
    %173 = vector.shape_cast %172 : vector<1x1x1x8x128xf32> to vector<8x128xf32>
    %174 = vector.shape_cast %171 : vector<8x128xf32> to vector<1x1x1x8x128xf32>
    tpu.vector_store %arg7[%c0_77, %c0_78, %c3_79, %c0_80, %c0_81], %174 {strides = array<i32>} : memref<1x1x5x8x128xf32, #tpu.memory_space<vmem>>, vector<1x1x1x8x128xf32>,
    %175 = arith.maximumf %134, %171 : vector<8x128xf32>
    %176 = arith.addf %135, %166 : vector<8x128xf32>
    %177 = arith.mulf %140, %171 : vector<8x128xf32>
    %178 = arith.addf %137, %177 : vector<8x128xf32>
    %179 = arith.select %164, %8, %17 : vector<8x128xi1>, vector<8x128xf32>
    %180 = arith.mulf %139, %179 : vector<8x128xf32>
    %181 = arith.mulf %140, %8 : vector<8x128xf32>
    %cst_82 = arith.constant 4.000000e+00 : f32
    %182 = vector.broadcast %cst_82 : f32 to vector<8x128xf32>
    %183 = arith.cmpf ogt, %14, %182 : vector<8x128xf32>
    %184 = arith.extui %183 : vector<8x128xi1> to vector<8x128xi32>
    %185 = arith.sitofp %184 : vector<8x128xi32> to vector<8x128xf32>
    %186 = arith.mulf %13, %185 : vector<8x128xf32>
    %cst_83 = arith.constant 1.000000e+00 : f32
    %187 = vector.broadcast %cst_83 : f32 to vector<8x128xf32>
    %188 = arith.subf %187, %186 : vector<8x128xf32>
    %c0_84 = arith.constant 0 : index
    %c0_85 = arith.constant 0 : index
    %c4 = arith.constant 4 : index
    %c0_86 = arith.constant 0 : index
    %c0_87 = arith.constant 0 : index
    %189 = vector.load %arg2[%c0_84, %c0_85, %c4, %c0_86, %c0_87] : memref<1x1x5x8x128xf32, #tpu.memory_space<vmem>>, vector<1x1x1x8x128xf32>
    %190 = vector.shape_cast %189 : vector<1x1x1x8x128xf32> to vector<8x128xf32>
    %191 = arith.mulf %190, %188 : vector<8x128xf32>
    %192 = arith.mulf %4, %152 : vector<8x128xf32>
    %193 = arith.addf %192, %191 : vector<8x128xf32>
    %194 = arith.mulf %181, %15 : vector<8x128xf32>
    %cst_88 = arith.constant 1.000000e+00 : f32
    %195 = vector.broadcast %cst_88 : f32 to vector<8x128xf32>
    %196 = arith.addf %195, %194 : vector<8x128xf32>
    %197 = arith.cmpf ogt, %193, %196 : vector<8x128xf32>
    %198 = arith.extui %197 : vector<8x128xi1> to vector<8x128xi32>
    %199 = arith.sitofp %198 : vector<8x128xi32> to vector<8x128xf32>
    %200 = arith.addf %159, %199 : vector<8x128xf32>
    %201 = arith.addf %160, %200 : vector<8x128xf32>
    %cst_89 = arith.constant 1.000000e+00 : f32
    %202 = vector.broadcast %cst_89 : f32 to vector<8x128xf32>
    %203 = arith.cmpf olt, %201, %202 : vector<8x128xf32>
    %cst_90 = arith.constant 1.000000e+00 : f32
    %204 = vector.broadcast %cst_90 : f32 to vector<8x128xf32>
    %205 = arith.cmpf ogt, %201, %204 : vector<8x128xf32>
    %206 = arith.extui %203 : vector<8x128xi1> to vector<8x128xi32>
    %207 = arith.sitofp %206 : vector<8x128xi32> to vector<8x128xf32>
    %208 = arith.extui %205 : vector<8x128xi1> to vector<8x128xi32>
    %209 = arith.sitofp %208 : vector<8x128xi32> to vector<8x128xf32>
    %cst_91 = arith.constant 1.000000e+00 : f32
    %210 = vector.broadcast %cst_91 : f32 to vector<8x128xf32>
    %211 = arith.subf %210, %207 : vector<8x128xf32>
    %212 = arith.subf %211, %209 : vector<8x128xf32>
    %c0_92 = arith.constant 0 : index
    %c0_93 = arith.constant 0 : index
    %c4_94 = arith.constant 4 : index
    %c0_95 = arith.constant 0 : index
    %c0_96 = arith.constant 0 : index
    %213 = vector.load %arg7[%c0_92, %c0_93, %c4_94, %c0_95, %c0_96] : memref<1x1x5x8x128xf32, #tpu.memory_space<vmem>>, vector<1x1x1x8x128xf32>
    %214 = vector.shape_cast %213 : vector<1x1x1x8x128xf32> to vector<8x128xf32>
    %215 = vector.shape_cast %212 : vector<8x128xf32> to vector<1x1x1x8x128xf32>
    tpu.vector_store %arg7[%c0_92, %c0_93, %c4_94, %c0_95, %c0_96], %215 {strides = array<i32>} : memref<1x1x5x8x128xf32, #tpu.memory_space<vmem>>, vector<1x1x1x8x128xf32>,
    %216 = arith.maximumf %175, %212 : vector<8x128xf32>
    %217 = arith.addf %176, %207 : vector<8x128xf32>
    %218 = arith.mulf %181, %212 : vector<8x128xf32>
    %219 = arith.addf %178, %218 : vector<8x128xf32>
    %220 = arith.select %205, %8, %17 : vector<8x128xi1>, vector<8x128xf32>
    %221 = arith.mulf %180, %220 : vector<8x128xf32>
    %222 = arith.mulf %11, %219 : vector<8x128xf32>
    %223 = arith.addf %222, %10 : vector<8x128xf32>
    %224 = arith.mulf %223, %221 : vector<8x128xf32>
    %cst_97 = arith.constant 1.000000e+00 : f32
    %225 = vector.broadcast %cst_97 : f32 to vector<8x128xf32>
    %226 = arith.subf %225, %216 : vector<8x128xf32>
    %227 = arith.mulf %181, %11 : vector<8x128xf32>
    %228 = arith.mulf %227, %226 : vector<8x128xf32>
    %229 = arith.mulf %224, %216 : vector<8x128xf32>
    %230 = arith.addf %228, %229 : vector<8x128xf32>
    %c0_98 = arith.constant 0 : index
    %c0_99 = arith.constant 0 : index
    %231 = vector.load %arg8[%c0_98, %c0_99] : memref<8x128xf32, #tpu.memory_space<vmem>>, vector<8x128xf32>
    tpu.vector_store %arg8[%c0_98, %c0_99], %230 {strides = array<i32>} : memref<8x128xf32, #tpu.memory_space<vmem>>, vector<8x128xf32>,
    %232 = arith.mulf %193, %226 : vector<8x128xf32>
    %c0_100 = arith.constant 0 : index
    %c0_101 = arith.constant 0 : index
    %233 = vector.load %arg9[%c0_100, %c0_101] : memref<8x128xf32, #tpu.memory_space<vmem>>, vector<8x128xf32>
    tpu.vector_store %arg9[%c0_100, %c0_101], %232 {strides = array<i32>} : memref<8x128xf32, #tpu.memory_space<vmem>>, vector<8x128xf32>,
    %c0_102 = arith.constant 0 : index
    %c0_103 = arith.constant 0 : index
    %234 = vector.load %arg10[%c0_102, %c0_103] : memref<8x128xf32, #tpu.memory_space<vmem>>, vector<8x128xf32>
    tpu.vector_store %arg10[%c0_102, %c0_103], %216 {strides = array<i32>} : memref<8x128xf32, #tpu.memory_space<vmem>>, vector<8x128xf32>,
    %c0_104 = arith.constant 0 : index
    %c0_105 = arith.constant 0 : index
    %235 = vector.load %arg11[%c0_104, %c0_105] : memref<8x128xf32, #tpu.memory_space<vmem>>, vector<8x128xf32>
    tpu.vector_store %arg11[%c0_104, %c0_105], %217 {strides = array<i32>} : memref<8x128xf32, #tpu.memory_space<vmem>>, vector<8x128xf32>,
    return
  }
  func.func @transform_0(%arg0: i32, %arg1: i32) -> (i32, i32, i32, i32, i32) {
    %c0_i32 = arith.constant 0 : i32
    %c0_i32_0 = arith.constant 0 : i32
    %c0_i32_1 = arith.constant 0 : i32
    %c0_i32_2 = arith.constant 0 : i32
    return %arg0, %arg1, %c0_i32, %c0_i32_0, %c0_i32_1 : i32, i32, i32, i32, i32
  }
  func.func @transform_1(%arg0: i32, %arg1: i32) -> (i32, i32, i32) {
    %c0_i32 = arith.constant 0 : i32
    %c0_i32_0 = arith.constant 0 : i32
    %c0_i32_1 = arith.constant 0 : i32
    return %arg0, %c0_i32, %c0_i32_0 : i32, i32, i32
  }
  func.func @transform_2(%arg0: i32, %arg1: i32) -> (i32, i32, i32) {
    %c0_i32 = arith.constant 0 : i32
    %c0_i32_0 = arith.constant 0 : i32
    %c0_i32_1 = arith.constant 0 : i32
    return %arg0, %c0_i32, %c0_i32_0 : i32, i32, i32
  }
  func.func @transform_3(%arg0: i32, %arg1: i32) -> (i32, i32, i32) {
    %c0_i32 = arith.constant 0 : i32
    %c0_i32_0 = arith.constant 0 : i32
    %c0_i32_1 = arith.constant 0 : i32
    return %arg0, %c0_i32, %c0_i32_0 : i32, i32, i32
  }
  func.func @transform_4(%arg0: i32, %arg1: i32) -> (i32, i32, i32) {
    %c0_i32 = arith.constant 0 : i32
    %c0_i32_0 = arith.constant 0 : i32
    %c0_i32_1 = arith.constant 0 : i32
    return %arg0, %c0_i32, %c0_i32_0 : i32, i32, i32
  }
  func.func @transform_5(%arg0: i32, %arg1: i32) -> (i32, i32, i32, i32, i32) {
    %c0_i32 = arith.constant 0 : i32
    %c0_i32_0 = arith.constant 0 : i32
    %c0_i32_1 = arith.constant 0 : i32
    %c0_i32_2 = arith.constant 0 : i32
    return %arg0, %arg1, %c0_i32, %c0_i32_0, %c0_i32_1 : i32, i32, i32, i32, i32
  }
}

</mosaic_0001>

<llo_original>
// kernel: tpu_custom_call.1
$region0: #{tpu_custom_call.1}
  #allocation0 [shape = 'u32[]', space=smem, size = 0x4, offset = 0x4, fixed_abs, tag = 'smem constant byte address 0x4 - core index']
  #allocation1 [shape = 'u32[144,128]{1,0:T(1,128)}', space=vmem, size = 0x12000, scoped, tag = 'internal scratch']
  #allocation2 [shape = 'f32[8,128]{1,0:T(8,128)}', space=vmem, size = 0x1000, scoped, tag = 'scratch operand']
  #allocation3 [shape = 'f32[8,128]{1,0:T(8,128)}', space=vmem, size = 0x1000, scoped, tag = 'scratch operand']
  #allocation4 [shape = 'f32[8,128]{1,0:T(8,128)}', space=vmem, size = 0x1000, scoped, tag = 'scratch operand']
  #allocation5 [shape = 'f32[8,128]{1,0:T(8,128)}', space=vmem, size = 0x1000, scoped, tag = 'scratch operand']
  %s0 = inlined_call_operand.hbm [shape: f32[1,4,5,8,128], index: 0, kind: input, shape index: {}]
  %s1 = inlined_call_operand.hbm [shape: f32[1,8,128], index: 1, kind: input, shape index: {}]
  %s2 = inlined_call_operand.hbm [shape: f32[1,8,128], index: 2, kind: input, shape index: {}]
  %s3 = inlined_call_operand.hbm [shape: f32[1,8,128], index: 3, kind: input, shape index: {}]
  %s4 = inlined_call_operand.hbm [shape: f32[1,8,128], index: 4, kind: input, shape index: {}]
  %s5 = inlined_call_operand.hbm [shape: f32[1,4,5,8,128], index: 5, kind: output, shape index: {}]
  %s6 = sld [smem:[#allocation0]]
  $region77: #{tpu_custom_call.1} parent=0
    _
  %s8 = ssub.s32 1, %s6
  %s9 = scalar_select 0, %s8, %s6
  $region1: #{tpu_custom_call.1} parent=0
    #allocation6 [shape = 'u8[40960]{0}', space=vmem, size = 0xa000, scoped, tag = 'input window, operand 0']
    #allocation7 [shape = 's32[2]{0}', space=sflag, size = 0x8, scoped, tag = 'scoped memory for tpu_custom_call.1']
    #allocation8 [shape = 's32[2]{0}', space=sflag, size = 0x8, scoped, tag = 'scoped memory for tpu_custom_call.1']
    #allocation9 [shape = 'u8[4096]{0}', space=vmem, size = 0x1000, scoped, tag = 'input window, operand 1, single buffered']
    #allocation10 [shape = 's32[1]{0}', space=sflag, size = 0x4, scoped, tag = 'scoped memory for tpu_custom_call.1']
    #allocation11 [shape = 'u8[4096]{0}', space=vmem, size = 0x1000, scoped, tag = 'input window, operand 2, single buffered']
    #allocation12 [shape = 'u8[4096]{0}', space=vmem, size = 0x1000, scoped, tag = 'input window, operand 3, single buffered']
    #allocation13 [shape = 's32[1]{0}', space=sflag, size = 0x4, scoped, tag = 'scoped memory for tpu_custom_call.1']
    #allocation14 [shape = 'u8[4096]{0}', space=vmem, size = 0x1000, scoped, tag = 'input window, operand 4, single buffered']
    #allocation15 [shape = 'u8[40960]{0}', space=vmem, size = 0xa000, scoped, tag = 'output window, operand 0']
    %10 = vsyncpa [#allocation7], 0
    %s11 = scalar_lea.sflag [#allocation7], 1
    %12 = vsyncpa %s11, 0
    %13 = vsyncpa [#allocation10], 0
    %14 = vsyncpa [#allocation13], 0
    %15 = vsyncpa [#allocation8], 0
    %s16 = scalar_lea.sflag [#allocation8], 1
    %17 = vsyncpa %s16, 0
    loop: start=0, step=1, limit=6
    $region2: #{tpu_custom_call.1} parent=1 // loop_pre_header
      _
    $region3: #{tpu_custom_call.1} parent=1 // loop_header
      %s19 = sphi 0, %s23
      %p20 = scmp.ge.s32.totalorder %s19, 6
      %s26 = sphi 0, %s38
      %s27 = sphi 0, %s34
      %s28 = sphi 0, %s26
      %s29 = sphi 0, %s27
      %s30 = sphi 0, %s28
      %s31 = sphi 0, %s29
      %s43 = sphi 0, %s45
      %s46 = sphi 0, %s43
      %s47 = sphi 0, %s46
      %s63 = sphi 0, %s47
      %s69 = sphi 0, %s71
      %s72 = sphi 0, %s69
      %s73 = sphi 0, %s72
      %s89 = sphi 0, %s73
      %s95 = sphi 0, %s97
      %s98 = sphi 0, %s95
      %s99 = sphi 0, %s98
      %s115 = sphi 0, %s99
      %s121 = sphi 0, %s123
      %s124 = sphi 0, %s121
      %s125 = sphi 0, %s124
      %s141 = sphi 0, %s125
      %s147 = sphi 0, %s149
      %s150 = sphi 0, %s147
      %s151 = sphi 0, %s150
      %s167 = sphi 0, %s151
      %s175 = sphi 0, %s177
      %s178 = sphi 0, %s175
      %s179 = sphi 0, %s178
      %s195 = sphi 0, %s179
    $region4: #{tpu_custom_call.1} parent=1 // loop_header_branch
      %22 = sbr.rel (%p20) target = $region8
    $region5: #{tpu_custom_call.1} parent=1 // loop_body
      %s24 = ssub.s32 %s19, 1
      %s25 = ssub.s32 %s19, 2
      %s32 = sadd.s32 1, %s27
      %p33 = scmp.ge.s32.totalorder %s32, 4
      %s34 = scalar_select %p33, 0, %s32
      %s35 = sadd.s32 1, %s26
      %s36 = scalar_select %p33, %s35, %s26
      %p37 = scmp.ge.s32.totalorder %s36, 1
      %s38 = scalar_select %p37, 0, %s36
      %s39 = ssub.s32 %s26, %s38
      %s40 = ssub.s32 %s27, %s34
      %s41 = sor.u32 %s39, %s40
      %p42 = scmp.eq.s32.totalorder %s41, 0
      %s44 = sadd.s32 %s43, 1
      %s45 = scalar_select %p42, %s43, %s44
      %p48 = pneg %p42
      %p49 = scmp.eq.s32.totalorder %s19, 3
      %p50 = por %p48, %p49
      %p51 = scmp.ne.s32.totalorder %s43, %s46
      %p52 = scmp.eq.s32.totalorder %s19, 0
      %p53 = por %p51, %p52
      %p54 = scmp.ne.s32.totalorder %s43, %s46
      %p55 = scmp.eq.s32.totalorder %s24, 3
      %p56 = por %p54, %p55
      %p57 = scmp.ne.s32.totalorder %s46, %s47
      %p58 = scmp.eq.s32.totalorder %s24, 0
      %p59 = por %p57, %p58
      %p60 = scmp.ne.s32.totalorder %s46, %s47
      %p61 = scmp.eq.s32.totalorder %s25, 3
      %p62 = por %p60, %p61
      %p64 = scmp.ne.s32.totalorder %s47, %s63
      %p65 = scmp.eq.s32.totalorder %s25, 0
      %p66 = por %p64, %p65
      %s67 = ssub.s32 %s26, %s38
      %p68 = scmp.eq.s32.totalorder %s67, 0
      %s70 = sadd.s32 %s69, 1
      %s71 = scalar_select %p68, %s69, %s70
      %p74 = pneg %p68
      %p75 = scmp.eq.s32.totalorder %s19, 3
      %p76 = por %p74, %p75
      %p77 = scmp.ne.s32.totalorder %s69, %s72
      %p78 = scmp.eq.s32.totalorder %s19, 0
      %p79 = por %p77, %p78
      %p80 = scmp.ne.s32.totalorder %s69, %s72
      %p81 = scmp.eq.s32.totalorder %s24, 3
      %p82 = por %p80, %p81
      %p83 = scmp.ne.s32.totalorder %s72, %s73
      %p84 = scmp.eq.s32.totalorder %s24, 0
      %p85 = por %p83, %p84
      %p86 = scmp.ne.s32.totalorder %s72, %s73
      %p87 = scmp.eq.s32.totalorder %s25, 3
      %p88 = por %p86, %p87
      %p90 = scmp.ne.s32.totalorder %s73, %s89
      %p91 = scmp.eq.s32.totalorder %s25, 0
      %p92 = por %p90, %p91
      %s93 = ssub.s32 %s26, %s38
      %p94 = scmp.eq.s32.totalorder %s93, 0
      %s96 = sadd.s32 %s95, 1
      %s97 = scalar_select %p94, %s95, %s96
      %p100 = pneg %p94
      %p101 = scmp.eq.s32.totalorder %s19, 3
      %p102 = por %p100, %p101
      %p103 = scmp.ne.s32.totalorder %s95, %s98
      %p104 = scmp.eq.s32.totalorder %s19, 0
      %p105 = por %p103, %p104
      %p106 = scmp.ne.s32.totalorder %s95, %s98
      %p107 = scmp.eq.s32.totalorder %s24, 3
      %p108 = por %p106, %p107
      %p109 = scmp.ne.s32.totalorder %s98, %s99
      %p110 = scmp.eq.s32.totalorder %s24, 0
      %p111 = por %p109, %p110
      %p112 = scmp.ne.s32.totalorder %s98, %s99
      %p113 = scmp.eq.s32.totalorder %s25, 3
      %p114 = por %p112, %p113
      %p116 = scmp.ne.s32.totalorder %s99, %s115
      %p117 = scmp.eq.s32.totalorder %s25, 0
      %p118 = por %p116, %p117
      %s119 = ssub.s32 %s26, %s38
      %p120 = scmp.eq.s32.totalorder %s119, 0
      %s122 = sadd.s32 %s121, 1
      %s123 = scalar_select %p120, %s121, %s122
      %p126 = pneg %p120
      %p127 = scmp.eq.s32.totalorder %s19, 3
      %p128 = por %p126, %p127
      %p129 = scmp.ne.s32.totalorder %s121, %s124
      %p130 = scmp.eq.s32.totalorder %s19, 0
      %p131 = por %p129, %p130
      %p132 = scmp.ne.s32.totalorder %s121, %s124
      %p133 = scmp.eq.s32.totalorder %s24, 3
      %p134 = por %p132, %p133
      %p135 = scmp.ne.s32.totalorder %s124, %s125
      %p136 = scmp.eq.s32.totalorder %s24, 0
      %p137 = por %p135, %p136
      %p138 = scmp.ne.s32.totalorder %s124, %s125
      %p139 = scmp.eq.s32.totalorder %s25, 3
      %p140 = por %p138, %p139
      %p142 = scmp.ne.s32.totalorder %s125, %s141
      %p143 = scmp.eq.s32.totalorder %s25, 0
      %p144 = por %p142, %p143
      %s145 = ssub.s32 %s26, %s38
      %p146 = scmp.eq.s32.totalorder %s145, 0
      %s148 = sadd.s32 %s147, 1
      %s149 = scalar_select %p146, %s147, %s148
      %p152 = pneg %p146
      %p153 = scmp.eq.s32.totalorder %s19, 3
      %p154 = por %p152, %p153
      %p155 = scmp.ne.s32.totalorder %s147, %s150
      %p156 = scmp.eq.s32.totalorder %s19, 0
      %p157 = por %p155, %p156
      %p158 = scmp.ne.s32.totalorder %s147, %s150
      %p159 = scmp.eq.s32.totalorder %s24, 3
      %p160 = por %p158, %p159
      %p161 = scmp.ne.s32.totalorder %s150, %s151
      %p162 = scmp.eq.s32.totalorder %s24, 0
      %p163 = por %p161, %p162
      %p164 = scmp.ne.s32.totalorder %s150, %s151
      %p165 = scmp.eq.s32.totalorder %s25, 3
      %p166 = por %p164, %p165
      %p168 = scmp.ne.s32.totalorder %s151, %s167
      %p169 = scmp.eq.s32.totalorder %s25, 0
      %p170 = por %p168, %p169
      %s171 = ssub.s32 %s26, %s38
      %s172 = ssub.s32 %s27, %s34
      %s173 = sor.u32 %s171, %s172
      %p174 = scmp.eq.s32.totalorder %s173, 0
      %s176 = sadd.s32 %s175, 1
      %s177 = scalar_select %p174, %s175, %s176
      %p180 = pneg %p174
      %p181 = scmp.eq.s32.totalorder %s19, 3
      %p182 = por %p180, %p181
      %p183 = scmp.ne.s32.totalorder %s175, %s178
      %p184 = scmp.eq.s32.totalorder %s19, 0
      %p185 = por %p183, %p184
      %p186 = scmp.ne.s32.totalorder %s175, %s178
      %p187 = scmp.eq.s32.totalorder %s24, 3
      %p188 = por %p186, %p187
      %p189 = scmp.ne.s32.totalorder %s178, %s179
      %p190 = scmp.eq.s32.totalorder %s24, 0
      %p191 = por %p189, %p190
      %p192 = scmp.ne.s32.totalorder %s178, %s179
      %p193 = scmp.eq.s32.totalorder %s25, 3
      %p194 = por %p192, %p193
      %p196 = scmp.ne.s32.totalorder %s179, %s195
      %p197 = scmp.eq.s32.totalorder %s25, 0
      %p198 = por %p196, %p197
      %p199 = scmp.le.s32.totalorder 1, %s19
      %p200 = scmp.lt.s32.totalorder %s19, 5
      %p201 = pnand %p199, %p200
      %p202 = pneg %p201
      // Predicated region
      $region9: #{tpu_custom_call.1} parent=5 // pred_check
        _
      $region10: #{tpu_custom_call.1} parent=5 // pred_check_branch
        %204 = sbr.rel (%p201) target = $region12
      $region11: #{tpu_custom_call.1} parent=5 // pred_region
        %s205 = ssub.s32 %s19, 1
        // Predicated region
        $region13: #{tpu_custom_call.1} parent=11 // pred_check
          %p206 = pneg %p85
        $region14: #{tpu_custom_call.1} parent=11 // pred_check_branch
          %208 = sbr.rel (%p206) target = $region16
        $region15: #{tpu_custom_call.1} parent=11 // pred_region
          %s210 = ssub.s32 128, 128
          %211 = vsyncadd [#allocation10], %s210
          %s212 = smul.addr %s28, 128
          %s213 = scalar_lea.hbm %s1, %s212
          %s215 = sshll.u32 [#allocation9], 4
          %s216 = int_to_ptr.vmem [resolvable:$true] %s215
          %218 = dma.hbm_to_vmem [thread:$0]  %s213, 128, %s216, [#allocation10]
        $region16: #{tpu_custom_call.1} parent=11 // pred_fallthru
          _
        // Predicated region
        $region17: #{tpu_custom_call.1} parent=11 // pred_check
          %p219 = pneg %p111
        $region18: #{tpu_custom_call.1} parent=11 // pred_check_branch
          %221 = sbr.rel (%p219) target = $region20
        $region19: #{tpu_custom_call.1} parent=11 // pred_region
          %s223 = ssub.s32 128, 128
          %224 = vsyncadd [#allocation10], %s223
          %s225 = smul.addr %s28, 128
          %s226 = scalar_lea.hbm %s2, %s225
          %s228 = sshll.u32 [#allocation11], 4
          %s229 = int_to_ptr.vmem [resolvable:$true] %s228
          %231 = dma.hbm_to_vmem [thread:$0]  %s226, 128, %s229, [#allocation10]
        $region20: #{tpu_custom_call.1} parent=11 // pred_fallthru
          _
        // Predicated region
        $region21: #{tpu_custom_call.1} parent=11 // pred_check
          %p232 = pneg %p137
        $region22: #{tpu_custom_call.1} parent=11 // pred_check_branch
          %234 = sbr.rel (%p232) target = $region24
        $region23: #{tpu_custom_call.1} parent=11 // pred_region
          %s236 = ssub.s32 128, 128
          %237 = vsyncadd [#allocation13], %s236
          %s238 = smul.addr %s28, 128
          %s239 = scalar_lea.hbm %s3, %s238
          %s241 = sshll.u32 [#allocation12], 4
          %s242 = int_to_ptr.vmem [resolvable:$true] %s241
          %244 = dma.hbm_to_vmem [thread:$0]  %s239, 128, %s242, [#allocation13]
        $region24: #{tpu_custom_call.1} parent=11 // pred_fallthru
          _
        // Predicated region
        $region25: #{tpu_custom_call.1} parent=11 // pred_check
          %p245 = pneg %p163
        $region26: #{tpu_custom_call.1} parent=11 // pred_check_branch
          %247 = sbr.rel (%p245) target = $region28
        $region27: #{tpu_custom_call.1} parent=11 // pred_region
          %s249 = ssub.s32 128, 128
          %250 = vsyncadd [#allocation13], %s249
          %s251 = smul.addr %s28, 128
          %s252 = scalar_lea.hbm %s4, %s251
          %s254 = sshll.u32 [#allocation14], 4
          %s255 = int_to_ptr.vmem [resolvable:$true] %s254
          %257 = dma.hbm_to_vmem [thread:$0]  %s252, 128, %s255, [#allocation13]
        $region28: #{tpu_custom_call.1} parent=11 // pred_fallthru
          _
      $region12: #{tpu_custom_call.1} parent=5 // pred_fallthru
        _
      %p258 = scmp.lt.s32.totalorder %s19, 4
      // Predicated region
      $region29: #{tpu_custom_call.1} parent=5 // pred_check
        %p259 = pneg %p258
      $region30: #{tpu_custom_call.1} parent=5 // pred_check_branch
        %261 = sbr.rel (%p259) target = $region32
      $region31: #{tpu_custom_call.1} parent=5 // pred_region
        // Predicated region
        $region33: #{tpu_custom_call.1} parent=31 // pred_check
          %p262 = pneg %p53
        $region34: #{tpu_custom_call.1} parent=31 // pred_check_branch
          %264 = sbr.rel (%p262) target = $region36
        $region35: #{tpu_custom_call.1} parent=31 // pred_region
          %s265 = sand.u32 %s43, 1
          %s266 = scalar_lea.sflag [#allocation7], %s265
          %s267 = sand.u32 %s43, 1
          %s268 = smul.addr %s267, 40
          %s269 = scalar_lea.vmem [#allocation6], %s268
          %s271 = ssub.s32 640, 640
          %272 = vsyncadd %s266, %s271
          %s273 = smul.addr %s27, 5
          %s274 = smul.addr %s26, 20
          %s275 = sadd.s32 %s273, %s274
          %s276 = smul.addr %s275, 128
          %s277 = scalar_lea.hbm %s0, %s276
          %s278 = sshll.u32 %s269, 4
          %s279 = int_to_ptr.vmem [resolvable:$true] %s278
          %284 = dma.hbm_to_vmem [thread:$0]  %s277, 640, %s279, %s266, 128, 128, 8
        $region36: #{tpu_custom_call.1} parent=31 // pred_fallthru
          _
      $region32: #{tpu_custom_call.1} parent=5 // pred_fallthru
        _
      %p285 = scmp.le.s32.totalorder 1, %s19
      %p286 = scmp.lt.s32.totalorder %s19, 5
      %p287 = pnand %p285, %p286
      %p288 = pneg %p287
      // Predicated region
      $region37: #{tpu_custom_call.1} parent=5 // pred_check
        _
      $region38: #{tpu_custom_call.1} parent=5 // pred_check_branch
        %290 = sbr.rel (%p287) target = $region40
      $region39: #{tpu_custom_call.1} parent=5 // pred_region
        %s291 = ssub.s32 %s19, 1
        %s292 = sand.u32 %s46, 1
        %s293 = scalar_lea.sflag [#allocation7], %s292
        %s294 = sand.u32 %s46, 1
        %s295 = smul.addr %s294, 40
        %s296 = scalar_lea.vmem [#allocation6], %s295
        // Predicated region
        $region41: #{tpu_custom_call.1} parent=39 // pred_check
          %p297 = pneg %p59
        $region42: #{tpu_custom_call.1} parent=39 // pred_check_branch
          %299 = sbr.rel (%p297) target = $region44
        $region43: #{tpu_custom_call.1} parent=39 // pred_region
          %300 = dma.done %s293, 640
        $region44: #{tpu_custom_call.1} parent=39 // pred_fallthru
          _
        // Predicated region
        $region45: #{tpu_custom_call.1} parent=39 // pred_check
          %p301 = pneg %p85
        $region46: #{tpu_custom_call.1} parent=39 // pred_check_branch
          %303 = sbr.rel (%p301) target = $region48
        $region47: #{tpu_custom_call.1} parent=39 // pred_region
          %304 = dma.done [#allocation10], 128
        $region48: #{tpu_custom_call.1} parent=39 // pred_fallthru
          _
        // Predicated region
        $region49: #{tpu_custom_call.1} parent=39 // pred_check
          %p305 = pneg %p111
        $region50: #{tpu_custom_call.1} parent=39 // pred_check_branch
          %307 = sbr.rel (%p305) target = $region52
        $region51: #{tpu_custom_call.1} parent=39 // pred_region
          %308 = dma.done [#allocation10], 128
        $region52: #{tpu_custom_call.1} parent=39 // pred_fallthru
          _
        // Predicated region
        $region53: #{tpu_custom_call.1} parent=39 // pred_check
          %p309 = pneg %p137
        $region54: #{tpu_custom_call.1} parent=39 // pred_check_branch
          %311 = sbr.rel (%p309) target = $region56
        $region55: #{tpu_custom_call.1} parent=39 // pred_region
          %312 = dma.done [#allocation13], 128
        $region56: #{tpu_custom_call.1} parent=39 // pred_fallthru
          _
        // Predicated region
        $region57: #{tpu_custom_call.1} parent=39 // pred_check
          %p313 = pneg %p163
        $region58: #{tpu_custom_call.1} parent=39 // pred_check_branch
          %315 = sbr.rel (%p313) target = $region60
        $region59: #{tpu_custom_call.1} parent=39 // pred_region
          %316 = dma.done [#allocation13], 128
        $region60: #{tpu_custom_call.1} parent=39 // pred_fallthru
          _
        %s317 = sand.u32 %s46, 1
        %s318 = scalar_lea.sflag [#allocation7], %s317
        %s319 = sand.u32 %s46, 1
        %s320 = smul.addr %s319, 40
        %s321 = scalar_lea.vmem [#allocation6], %s320
        %p322 = pneg %p59
        %p323 = pneg %p56
        %p324 = pneg %p85
        %p325 = pneg %p82
        %p326 = pneg %p111
        %p327 = pneg %p108
        %p328 = pneg %p137
        %p329 = pneg %p134
        %p330 = pneg %p163
        %p331 = pneg %p160
        %p332 = pneg %p191
        %p333 = pneg %p188
        %s334 = sand.u32 %s178, 1
        %s335 = scalar_lea.sflag [#allocation8], %s334
        %s336 = sand.u32 %s178, 1
        %s337 = smul.addr %s336, 40
        %s338 = scalar_lea.vmem [#allocation15], %s337
        %p339 = scmp.eq.s32.totalorder %s29, 0
        // Predicated region
        $region61: #{tpu_custom_call.1} parent=39 // pred_check
          %p340 = pneg %p339
        $region62: #{tpu_custom_call.1} parent=39 // pred_check_branch
          %342 = sbr.rel (%p340) target = $region64
        $region63: #{tpu_custom_call.1} parent=39 // pred_region
          %343 = vst [vmem:[#allocation2] sm:$0xff] 0.0
          %344 = vst [vmem:[#allocation3] sm:$0xff] 0.0
          %345 = vst [vmem:[#allocation4] sm:$0xff] 0.0
          %346 = vst [vmem:[#allocation5] sm:$0xff] 0.0
        $region64: #{tpu_custom_call.1} parent=39 // pred_fallthru
          _
        %v347 = vld [vmem:[#allocation9] sm:$0xff]
        %v348 = vld [vmem:[#allocation11] sm:$0xff]
        %v349 = vld [vmem:[#allocation12] sm:$0xff]
        %v350 = vld [vmem:[#allocation14] sm:$0xff]
        %v351 = vld [vmem:[#allocation2] sm:$0xff]
        %v352 = vld [vmem:[#allocation3] sm:$0xff]
        %v353 = vld [vmem:[#allocation4] sm:$0xff]
        %v354 = vld [vmem:[#allocation5] sm:$0xff]
        %v355 = vmul.f32 %v348, %v351
        %vm356 = vcmp.gt.f32.partialorder %v354, 0.0
        %v357 = vsel %vm356, 1, 0
        %v358 = vcvt.s32.f32 %v357
        %v359 = vmul.f32 %v353, %v358
        %v360 = vsub.f32 1.0, %v359
        %v361 = vld [vmem:[%s296] sm:$0xff]
        %v362 = vmul.f32 %v361, %v360
        %v363 = vmul.f32 %v347, %v352
        %v364 = vadd.f32 %v362, %v363
        %v365 = vmul.f32 %v349, %v355
        %v366 = vadd.f32 %v365, 1.0
        %vm367 = vcmp.gt.f32.partialorder %v364, %v366
        %v368 = vsel %vm367, 1, 0
        %v369 = vcvt.s32.f32 %v368
        %v370 = vadd.f32 %v369, 0.0
        %v371 = vadd.f32 %v370, 0.0
        %vm372 = vcmp.lt.f32.partialorder %v371, 1.0
        %vm373 = vcmp.gt.f32.partialorder %v371, 1.0
        %v374 = vsel %vm372, 1, 0
        %v375 = vcvt.s32.f32 %v374
        %v376 = vsel %vm373, 1, 0
        %v377 = vcvt.s32.f32 %v376
        %v378 = vsub.f32 1.0, %v375
        %v379 = vsub.f32 %v378, %v377
        %380 = vst [vmem:[%s338] sm:$0xff] %v379
        %v381 = vmax.f32 %v379, 0.0
        %v382 = vadd.f32 %v375, 0.0
        %v383 = vmul.f32 %v349, %v379
        %v384 = vadd.f32 %v383, 0.0
        %v385 = vsel %vm373, %v349, 1.0
        %v386 = vmul.f32 %v349, %v349
        %vm387 = vcmp.gt.f32.partialorder %v354, 1.0
        %v388 = vsel %vm387, 1, 0
        %v389 = vcvt.s32.f32 %v388
        %v390 = vmul.f32 %v353, %v389
        %v391 = vsub.f32 1.0, %v390
        %s392 = scalar_lea.vmem %s296, 8 [#allocation6]
        %v393 = vld [vmem:[%s392] sm:$0xff]
        %v394 = vmul.f32 %v393, %v391
        %v395 = vmul.f32 %v347, %v364
        %v396 = vadd.f32 %v395, %v394
        %v397 = vmul.f32 %v386, %v355
        %v398 = vadd.f32 %v397, 1.0
        %vm399 = vcmp.gt.f32.partialorder %v396, %v398
        %v400 = vsel %vm399, 1, 0
        %v401 = vcvt.s32.f32 %v400
        %v402 = vadd.f32 %v370, %v401
        %v403 = vadd.f32 %v371, %v402
        %vm404 = vcmp.lt.f32.partialorder %v403, 1.0
        %vm405 = vcmp.gt.f32.partialorder %v403, 1.0
        %v406 = vsel %vm404, 1, 0
        %v407 = vcvt.s32.f32 %v406
        %v408 = vsel %vm405, 1, 0
        %v409 = vcvt.s32.f32 %v408
        %v410 = vsub.f32 1.0, %v407
        %v411 = vsub.f32 %v410, %v409
        %s412 = scalar_lea.vmem %s338, 8 [#allocation15]
        %413 = vst [vmem:[%s412] sm:$0xff] %v411
        %v414 = vmax.f32 %v381, %v411
        %v415 = vadd.f32 %v382, %v407
        %v416 = vmul.f32 %v386, %v411
        %v417 = vadd.f32 %v384, %v416
        %v418 = vsel %vm405, %v349, 1.0
        %v419 = vmul.f32 %v385, %v418
        %v420 = vmul.f32 %v386, %v349
        %vm421 = vcmp.gt.f32.partialorder %v354, 2.0
        %v422 = vsel %vm421, 1, 0
        %v423 = vcvt.s32.f32 %v422
        %v424 = vmul.f32 %v353, %v423
        %v425 = vsub.f32 1.0, %v424
        %s426 = scalar_lea.vmem %s296, 16 [#allocation6]
        %v427 = vld [vmem:[%s426] sm:$0xff]
        %v428 = vmul.f32 %v427, %v425
        %v429 = vmul.f32 %v347, %v396
        %v430 = vadd.f32 %v429, %v428
        %v431 = vmul.f32 %v420, %v355
        %v432 = vadd.f32 %v431, 1.0
        %vm433 = vcmp.gt.f32.partialorder %v430, %v432
        %v434 = vsel %vm433, 1, 0
        %v435 = vcvt.s32.f32 %v434
        %v436 = vadd.f32 %v402, %v435
        %v437 = vadd.f32 %v403, %v436
        %vm438 = vcmp.lt.f32.partialorder %v437, 1.0
        %vm439 = vcmp.gt.f32.partialorder %v437, 1.0
        %v440 = vsel %vm438, 1, 0
        %v441 = vcvt.s32.f32 %v440
        %v442 = vsel %vm439, 1, 0
        %v443 = vcvt.s32.f32 %v442
        %v444 = vsub.f32 1.0, %v441
        %v445 = vsub.f32 %v444, %v443
        %s446 = scalar_lea.vmem %s338, 16 [#allocation15]
        %447 = vst [vmem:[%s446] sm:$0xff] %v445
        %v448 = vmax.f32 %v414, %v445
        %v449 = vadd.f32 %v415, %v441
        %v450 = vmul.f32 %v420, %v445
        %v451 = vadd.f32 %v417, %v450
        %v452 = vsel %vm439, %v349, 1.0
        %v453 = vmul.f32 %v419, %v452
        %v454 = vmul.f32 %v420, %v349
        %vm455 = vcmp.gt.f32.partialorder %v354, 3.0
        %v456 = vsel %vm455, 1, 0
        %v457 = vcvt.s32.f32 %v456
        %v458 = vmul.f32 %v353, %v457
        %v459 = vsub.f32 1.0, %v458
        %s460 = scalar_lea.vmem %s296, 24 [#allocation6]
        %v461 = vld [vmem:[%s460] sm:$0xff]
        %v462 = vmul.f32 %v461, %v459
        %v463 = vmul.f32 %v347, %v430
        %v464 = vadd.f32 %v463, %v462
        %v465 = vmul.f32 %v454, %v355
        %v466 = vadd.f32 %v465, 1.0
        %vm467 = vcmp.gt.f32.partialorder %v464, %v466
        %v468 = vsel %vm467, 1, 0
        %v469 = vcvt.s32.f32 %v468
        %v470 = vadd.f32 %v436, %v469
        %v471 = vadd.f32 %v437, %v470
        %vm472 = vcmp.lt.f32.partialorder %v471, 1.0
        %vm473 = vcmp.gt.f32.partialorder %v471, 1.0
        %v474 = vsel %vm472, 1, 0
        %v475 = vcvt.s32.f32 %v474
        %v476 = vsel %vm473, 1, 0
        %v477 = vcvt.s32.f32 %v476
        %v478 = vsub.f32 1.0, %v475
        %v479 = vsub.f32 %v478, %v477
        %s480 = scalar_lea.vmem %s338, 24 [#allocation15]
        %481 = vst [vmem:[%s480] sm:$0xff] %v479
        %v482 = vmax.f32 %v448, %v479
        %v483 = vadd.f32 %v449, %v475
        %v484 = vmul.f32 %v454, %v479
        %v485 = vadd.f32 %v451, %v484
        %v486 = vsel %vm473, %v349, 1.0
        %v487 = vmul.f32 %v453, %v486
        %v488 = vmul.f32 %v454, %v349
        %vm489 = vcmp.gt.f32.partialorder %v354, 4.0
        %v490 = vsel %vm489, 1, 0
        %v491 = vcvt.s32.f32 %v490
        %v492 = vmul.f32 %v353, %v491
        %v493 = vsub.f32 1.0, %v492
        %s494 = scalar_lea.vmem %s296, 32 [#allocation6]
        %v495 = vld [vmem:[%s494] sm:$0xff]
        %v496 = vmul.f32 %v495, %v493
        %v497 = vmul.f32 %v347, %v464
        %v498 = vadd.f32 %v497, %v496
        %v499 = vmul.f32 %v488, %v355
        %v500 = vadd.f32 %v499, 1.0
        %vm501 = vcmp.gt.f32.partialorder %v498, %v500
        %v502 = vsel %vm501, 1, 0
        %v503 = vcvt.s32.f32 %v502
        %v504 = vadd.f32 %v470, %v503
        %v505 = vadd.f32 %v471, %v504
        %vm506 = vcmp.lt.f32.partialorder %v505, 1.0
        %vm507 = vcmp.gt.f32.partialorder %v505, 1.0
        %v508 = vsel %vm506, 1, 0
        %v509 = vcvt.s32.f32 %v508
        %v510 = vsel %vm507, 1, 0
        %v511 = vcvt.s32.f32 %v510
        %v512 = vsub.f32 1.0, %v509
        %v513 = vsub.f32 %v512, %v511
        %s514 = scalar_lea.vmem %s338, 32 [#allocation15]
        %515 = vst [vmem:[%s514] sm:$0xff] %v513
        %v516 = vmax.f32 %v482, %v513
        %v517 = vadd.f32 %v483, %v509
        %v518 = vmul.f32 %v488, %v513
        %v519 = vadd.f32 %v485, %v518
        %v520 = vsel %vm507, %v349, 1.0
        %v521 = vmul.f32 %v487, %v520
        %v522 = vmul.f32 %v351, %v519
        %v523 = vadd.f32 %v522, %v350
        %v524 = vmul.f32 %v523, %v521
        %v525 = vsub.f32 1.0, %v516
        %v526 = vmul.f32 %v488, %v351
        %v527 = vmul.f32 %v526, %v525
        %v528 = vmul.f32 %v524, %v516
        %v529 = vadd.f32 %v527, %v528
        %530 = vst [vmem:[#allocation2] sm:$0xff] %v529
        %v531 = vmul.f32 %v498, %v525
        %532 = vst [vmem:[#allocation3] sm:$0xff] %v531
        %533 = vst [vmem:[#allocation4] sm:$0xff] %v516
        %534 = vst [vmem:[#allocation5] sm:$0xff] %v517
        %s535 = sand.u32 %s178, 1
        %s536 = scalar_lea.sflag [#allocation8], %s535
        %s537 = sand.u32 %s178, 1
        %s538 = smul.addr %s537, 40
        %s539 = scalar_lea.vmem [#allocation15], %s538
        // Predicated region
        $region65: #{tpu_custom_call.1} parent=39 // pred_check
          %p540 = pneg %p188
        $region66: #{tpu_custom_call.1} parent=39 // pred_check_branch
          %542 = sbr.rel (%p540) target = $region68
        $region67: #{tpu_custom_call.1} parent=39 // pred_region
          %s544 = ssub.s32 640, 640
          %545 = vsyncadd %s536, %s544
          %s546 = smul.addr %s29, 5
          %s547 = smul.addr %s28, 20
          %s548 = sadd.s32 %s546, %s547
          %s549 = smul.addr %s548, 128
          %s550 = scalar_lea.hbm %s5, %s549
          %s551 = sshll.u32 %s539, 4
          %s552 = int_to_ptr.vmem [resolvable:$true] %s551
          %557 = dma.vmem_to_hbm [thread:$0]  %s552, 640, %s550, %s536, 128, 128, 8
        $region68: #{tpu_custom_call.1} parent=39 // pred_fallthru
          _
      $region40: #{tpu_custom_call.1} parent=5 // pred_fallthru
        _
      %p558 = scmp.le.s32.totalorder 2, %s19
      // Predicated region
      $region69: #{tpu_custom_call.1} parent=5 // pred_check
        %p559 = pneg %p558
      $region70: #{tpu_custom_call.1} parent=5 // pred_check_branch
        %561 = sbr.rel (%p559) target = $region72
      $region71: #{tpu_custom_call.1} parent=5 // pred_region
        %s562 = ssub.s32 %s19, 2
        // Predicated region
        $region73: #{tpu_custom_call.1} parent=71 // pred_check
          %p563 = pneg %p194
        $region74: #{tpu_custom_call.1} parent=71 // pred_check_branch
          %565 = sbr.rel (%p563) target = $region76
        $region75: #{tpu_custom_call.1} parent=71 // pred_region
          %s566 = sand.u32 %s179, 1
          %s567 = scalar_lea.sflag [#allocation8], %s566
          %s568 = sand.u32 %s179, 1
          %s569 = smul.addr %s568, 40
          %s570 = scalar_lea.vmem [#allocation15], %s569
          %571 = dma.done %s567, 640
        $region76: #{tpu_custom_call.1} parent=71 // pred_fallthru
          _
      $region72: #{tpu_custom_call.1} parent=5 // pred_fallthru
        _
    $region6: #{tpu_custom_call.1} parent=1 // loop_footer
      %s23 = sadd.s32 1, %s19
    $region7: #{tpu_custom_call.1} parent=1 // loop_footer_branch
      %18 = sbr.rel target = $region3
    $region8: #{tpu_custom_call.1} parent=1 // loop_exit
      _
    %572 = vsyncpa [#allocation7], 1
    %s573 = scalar_lea.sflag [#allocation7], 1
    %574 = vsyncpa %s573, 1
    %575 = vsyncpa [#allocation10], 1
    %576 = vsyncpa [#allocation13], 1
    %577 = vsyncpa [#allocation8], 1
    %s578 = scalar_lea.sflag [#allocation8], 1
    %579 = vsyncpa %s578, 1

</llo_original>
